<compile_context>
chip_gen: v7x
topology: tpu7x:2x2x1
jax: 0.10.0
libtpu: 0.0.40
codegen_flags: <defaults>
</compile_context>

<pallas_src>
import math

import jax
import jax.numpy as jnp
from jax.experimental import pallas as pl
from jax.experimental.pallas import tpu as pltpu


# --------------------------------------------------------------------------- #
# Hardware queries (robust fallbacks so the script runs on any TPU gen).
# --------------------------------------------------------------------------- #
def _device_kind() -> str:
    try:
        return jax.devices()[0].device_kind.lower()
    except Exception:
        return ""


def _vmem_capacity_bytes() -> int:
    try:
        return int(pltpu.get_tpu_info().vmem_capacity_bytes)
    except Exception:
        kind = _device_kind()
        # v7x has 64 MiB per TensorCore; v5e/v6e have 128 MiB.
        return (64 << 20) if ("v7" in kind or "7x" in kind) else (128 << 20)


def _has_native_bf16_vpu() -> bool:
    """bf16 VALU/EUP exist on v6e/v7x; v5e and older widen to f32."""
    kind = _device_kind()
    for old in ("v2", "v3", "v4", "v5"):
        if old in kind:
            return False
    return True


def _vmem_limit(block_bytes: int) -> int:
    # 2 double-buffered input blocks + 2 output blocks, plus headroom,
    # capped at ~80% of physical VMEM for Mosaic internal scratch.
    cap = int(0.8 * _vmem_capacity_bytes())
    want = max(32 << 20, 4 * block_bytes + (8 << 20))
    return max(min(want, cap), 1 << 20)


def _cdiv(a: int, b: int) -> int:
    return -(-a // b)


# --------------------------------------------------------------------------- #
# Kernel
# --------------------------------------------------------------------------- #
def _make_gelu_kernel(compute_dtype):
    c = math.sqrt(2.0 / math.pi)

    def kernel(x_ref, o_ref):
        x = x_ref[...].astype(compute_dtype)
        # c * (x + 0.44715 * x^3) == c * x * (1 + 0.44715 * x^2)
        # NOTE: 0.44715 matches the source PyTorch module exactly.
        inner = c * x * (1.0 + 0.44715 * (x * x))
        y = 0.5 * x * (1.0 + jnp.tanh(inner))
        o_ref[...] = y.astype(o_ref.dtype)

    return kernel


# --------------------------------------------------------------------------- #
# Wrapper
# --------------------------------------------------------------------------- #
def gelu_pallas(
    x: jax.Array,
    *,
    target_block_bytes: int = 8 * 1024 * 1024,
    min_block_bytes: int = 1 * 1024 * 1024,
) -> jax.Array:
    """Tanh-approx GELU (coefficient 0.44715, as in the source module) via Pallas.

    Elementwise, so layout is irrelevant: flatten to a lane-dense 2-D slab and
    tile with multi-MiB blocks. No padding copies; ragged blocks are masked by
    Pallas. Falls back to flat 1-D 128-aligned tiling when the element count
    has no multiple-of-128 factor.
    """
    orig_shape = x.shape
    total = int(x.size)
    if total == 0:
        return x

    dtype = x.dtype
    itemsize = jnp.dtype(dtype).itemsize

    # bf16-native math on v6e/v7x keeps the kernel HBM-bound; f32 elsewhere.
    if dtype == jnp.bfloat16 and _has_native_bf16_vpu():
        compute_dtype = jnp.bfloat16
    else:
        compute_dtype = jnp.float32
    kernel = _make_gelu_kernel(compute_dtype)

    # Pick a lane width: largest multiple of 128 (capped) dividing the total
    # element count, so the reshape is exact (no pad / no slice).
    lane = None
    for cand in (4096, 2048, 1024, 512, 256, 128):
        if total % cand == 0:
            lane = cand
            break

    if lane is not None:
        rows = total // lane
        x2d = x.reshape(rows, lane)

        sublane_mult = {4: 8, 2: 16, 1: 32}.get(itemsize, 8)
        bytes_per_row = lane * itemsize
        target_rows = max(sublane_mult, target_block_bytes // bytes_per_row)

        if rows > target_rows:
            row_tile = (target_rows // sublane_mult) * sublane_mult
        else:
            # Small/medium tensors: still aim for >=4 grid steps (megacore
            # sharding on v7x + DMA/compute pipelining) as long as each block
            # stays >= min_block_bytes; otherwise use the full extent.
            min_rows = max(sublane_mult, _cdiv(min_block_bytes, bytes_per_row))
            cand_rows = max(_cdiv(rows, 4), min_rows)
            cand_rows = _cdiv(cand_rows, sublane_mult) * sublane_mult
            row_tile = rows if cand_rows >= rows else cand_rows

        block_bytes = row_tile * lane * itemsize
        out2d = pl.pallas_call(
            kernel,
            out_shape=jax.ShapeDtypeStruct((rows, lane), dtype),
            grid_spec=pltpu.PrefetchScalarGridSpec(
                num_scalar_prefetch=0,
                grid=(pl.cdiv(rows, row_tile),),
                in_specs=[pl.BlockSpec((row_tile, lane), lambda i: (i, 0))],
                out_specs=pl.BlockSpec((row_tile, lane), lambda i: (i, 0)),
            ),
            compiler_params=pltpu.CompilerParams(
                dimension_semantics=("parallel",),
                vmem_limit_bytes=_vmem_limit(block_bytes),
            ),
        )(x2d)
        return out2d.reshape(orig_shape)

    # Fallback: no multiple-of-128 factor. Flat 1-D, 128-aligned blocks; only
    # the single ragged last block is masked, and block size stays bounded.
    x1d = x.reshape(total)
    blk = max(128, ((target_block_bytes // itemsize) // 128) * 128)
    blk = min(blk, _cdiv(total, 128) * 128)
    block_bytes = blk * itemsize
    out1d = pl.pallas_call(
        kernel,
        out_shape=jax.ShapeDtypeStruct((total,), dtype),
        grid_spec=pltpu.PrefetchScalarGridSpec(
            num_scalar_prefetch=0,
            grid=(pl.cdiv(total, blk),),
            in_specs=[pl.BlockSpec((blk,), lambda i: (i,))],
            out_specs=pl.BlockSpec((blk,), lambda i: (i,)),
        ),
        compiler_params=pltpu.CompilerParams(
            dimension_semantics=("parallel",),
            vmem_limit_bytes=_vmem_limit(block_bytes),
        ),
    )(x1d)
    return out1d.reshape(orig_shape)


# --------------------------------------------------------------------------- #
# Reference (pure JAX, f32 math) and tests
# --------------------------------------------------------------------------- #
def gelu_reference(x: jax.Array) -> jax.Array:
    xf = x.astype(jnp.float32)
    c = jnp.sqrt(jnp.float32(2.0 / math.pi))
    y = 0.5 * xf * (1.0 + jnp.tanh(c * (xf + 0.44715 * xf ** 3)))
    return y.astype(x.dtype)


if __name__ == "__main__":
    key = jax.random.PRNGKey(0)
    keys = jax.random.split(key, 5)

    # Main case: transformer-style activation (batch=2, seq=8, hidden=32), f32.
    x = jax.random.normal(keys[0], (2, 8, 32), dtype=jnp.float32)
    y = gelu_pallas(x)
    jax.block_until_ready(y)
    assert y.shape == x.shape and y.dtype == x.dtype
    assert jnp.allclose(y, gelu_reference(x), atol=1e-5, rtol=1e-5), "mismatch (main)"

    # Fallback path: element count not divisible by 128 -> flat 1-D tiling
    # with a masked ragged block.
    x2 = jax.random.normal(keys[1], (3, 5, 33), dtype=jnp.float32)
    y2 = gelu_pallas(x2)
    jax.block_until_ready(y2)
    assert jnp.allclose(y2, gelu_reference(x2), atol=1e-5, rtol=1e-5), "mismatch (1-D fallback)"

    # Multi-step grid path (small target block forces >1 grid step).
    x3 = jax.random.normal(keys[2], (64, 1024), dtype=jnp.float32)
    y3 = gelu_pallas(x3, target_block_bytes=64 * 1024, min_block_bytes=16 * 1024)
    jax.block_until_ready(y3)
    assert jnp.allclose(y3, gelu_reference(x3), atol=1e-5, rtol=1e-5), "mismatch (multi-step)"

    # bf16 path (native bf16 math on v6e/v7x, f32 widening on older gens).
    x4 = jax.random.normal(keys[3], (4, 8, 128), dtype=jnp.bfloat16)
    y4 = gelu_pallas(x4)
    jax.block_until_ready(y4)
    assert y4.dtype == jnp.bfloat16
    assert jnp.allclose(
        y4.astype(jnp.float32), gelu_reference(x4).astype(jnp.float32),
        atol=5e-2, rtol=5e-2,
    ), "mismatch (bf16)"

    print("KERNEL_OK")
</pallas_src>

<mosaic_0001>
module attributes {stable_mosaic.version = 11 : i64} {
  func.func @kernel(%arg0: i32, %arg1: memref<1x512xf32, #tpu.memory_space<vmem>>, %arg2: memref<1x512xf32, #tpu.memory_space<vmem>>) attributes {dimension_semantics = [#tpu.dimension_semantics<parallel>], iteration_bounds = array<i64: 1>, scalar_prefetch = 0 : i64, scratch_operands = 0 : i64, tpu.core_type = #tpu.core_type<tc>, window_params = [{transform_indices = @transform_0, window_bounds = array<i64: 1, 512>}, {transform_indices = @transform_1, window_bounds = array<i64: 1, 512>}]} {
    %c0 = arith.constant 0 : index
    %c0_0 = arith.constant 0 : index
    %0 = vector.load %arg1[%c0, %c0_0] : memref<1x512xf32, #tpu.memory_space<vmem>>, vector<1x512xf32>
    %cst = arith.constant 0.797884583 : f32
    %1 = vector.broadcast %cst : f32 to vector<1x512xf32>
    %2 = arith.mulf %1, %0 : vector<1x512xf32>
    %3 = arith.mulf %0, %0 : vector<1x512xf32>
    %cst_1 = arith.constant 4.471500e-01 : f32
    %4 = vector.broadcast %cst_1 : f32 to vector<1x512xf32>
    %5 = arith.mulf %4, %3 : vector<1x512xf32>
    %cst_2 = arith.constant 1.000000e+00 : f32
    %6 = vector.broadcast %cst_2 : f32 to vector<1x512xf32>
    %7 = arith.addf %6, %5 : vector<1x512xf32>
    %8 = arith.mulf %2, %7 : vector<1x512xf32>
    %cst_3 = arith.constant 5.000000e-01 : f32
    %9 = vector.broadcast %cst_3 : f32 to vector<1x512xf32>
    %10 = arith.mulf %9, %0 : vector<1x512xf32>
    %11 = math.tanh %8 : vector<1x512xf32>
    %cst_4 = arith.constant 1.000000e+00 : f32
    %12 = vector.broadcast %cst_4 : f32 to vector<1x512xf32>
    %13 = arith.addf %12, %11 : vector<1x512xf32>
    %14 = arith.mulf %10, %13 : vector<1x512xf32>
    %c0_5 = arith.constant 0 : index
    %c0_6 = arith.constant 0 : index
    %15 = vector.load %arg2[%c0_5, %c0_6] : memref<1x512xf32, #tpu.memory_space<vmem>>, vector<1x512xf32>
    tpu.vector_store %arg2[%c0_5, %c0_6], %14 {strides = array<i32>} : memref<1x512xf32, #tpu.memory_space<vmem>>, vector<1x512xf32>,
    return
  }
  func.func @transform_0(%arg0: i32) -> (i32, i32) {
    %c0_i32 = arith.constant 0 : i32
    %c0_i32_0 = arith.constant 0 : i32
    return %arg0, %c0_i32 : i32, i32
  }
  func.func @transform_1(%arg0: i32) -> (i32, i32) {
    %c0_i32 = arith.constant 0 : i32
    %c0_i32_0 = arith.constant 0 : i32
    return %arg0, %c0_i32 : i32, i32
  }
}

</mosaic_0001>

<llo_original>
// kernel: tpu_custom_call.1
$region0: #{tpu_custom_call.1}
  #allocation0 [shape = 'u32[]', space=smem, size = 0x4, offset = 0x4, fixed_abs, tag = 'smem constant byte address 0x4 - core index']
  #allocation1 [shape = 'u32[144,128]{1,0:T(1,128)}', space=vmem, size = 0x12000, scoped, tag = 'internal scratch']
  %s0 = inlined_call_operand.hbm [shape: f32[1,512], index: 0, kind: input, shape index: {}]
  %s1 = inlined_call_operand.hbm [shape: f32[1,512], index: 1, kind: output, shape index: {}]
  %s2 = sld [smem:[#allocation0]]
  $region18: #{tpu_custom_call.1} parent=0
    _
  %s4 = ssub.s32 1, %s2
  %s5 = scalar_select 0, %s4, %s2
  $region1: #{tpu_custom_call.1} parent=0
    #allocation2 [shape = 'u8[2048]{0}', space=vmem, size = 0x800, scoped, tag = 'input window, operand 0, single buffered']
    #allocation3 [shape = 's32[1]{0}', space=sflag, size = 0x4, scoped, tag = 'scoped memory for tpu_custom_call.1']
    #allocation4 [shape = 's32[1]{0}', space=sflag, size = 0x4, scoped, tag = 'scoped memory for tpu_custom_call.1']
    #allocation5 [shape = 'u8[2048]{0}', space=vmem, size = 0x800, scoped, tag = 'output window, operand 0, single buffered']
    %6 = vsyncpa [#allocation3], 0
    %7 = vsyncpa [#allocation4], 0
    // Predicated region
    $region2: #{tpu_custom_call.1} parent=1 // pred_check
      _
    $region3: #{tpu_custom_call.1} parent=1 // pred_check_branch
      %9 = sbr.rel (0) target = $region5
    $region4: #{tpu_custom_call.1} parent=1 // pred_region
      %s11 = ssub.s32 64, 64
      %12 = vsyncadd [#allocation3], %s11
      %s14 = sshll.u32 [#allocation2], 4
      %s15 = int_to_ptr.vmem [resolvable:$true] %s14
      %17 = dma.hbm_to_vmem [thread:$0]  %s0, 64, %s15, [#allocation3]
    $region5: #{tpu_custom_call.1} parent=1 // pred_fallthru
      _
    // Predicated region
    $region6: #{tpu_custom_call.1} parent=1 // pred_check
      _
    $region7: #{tpu_custom_call.1} parent=1 // pred_check_branch
      %19 = sbr.rel (0) target = $region9
    $region8: #{tpu_custom_call.1} parent=1 // pred_region
      %20 = dma.done [#allocation3], 64
    $region9: #{tpu_custom_call.1} parent=1 // pred_fallthru
      _
    %v21 = vld [vmem:[#allocation2] sm:$0xf]
    %v22 = vmul.f32 %v21, 0.7978846
    %v23 = vmul.f32 %v21, %v21
    %v24 = vmul.f32 %v23, 0.44715
    %v25 = vadd.f32 %v24, 1.0
    %v26 = vmul.f32 %v22, %v25
    %v27 = vmul.f32 %v21, 0.5
    %v28 = vtanh.pop %v26
    %v29 = vadd.f32 %v28, 1.0
    %v30 = vmul.f32 %v27, %v29
    %v31 = vlaneseq
    %vm32 = vcmp.ge.s32.totalorder %v31, 0
    %vm33 = vcmp.lt.s32.totalorder %v31, 512
    %vm34 = vmand %vm32, %vm33
    %35 = vst.msk [vmem:[#allocation5] sm:$0xf] %vm34, %v30
    // Predicated region
    $region10: #{tpu_custom_call.1} parent=1 // pred_check
      _
    $region11: #{tpu_custom_call.1} parent=1 // pred_check_branch
      %37 = sbr.rel (0) target = $region13
    $region12: #{tpu_custom_call.1} parent=1 // pred_region
      %s39 = ssub.s32 64, 64
      %40 = vsyncadd [#allocation4], %s39
      %s42 = sshll.u32 [#allocation5], 4
      %s43 = int_to_ptr.vmem [resolvable:$true] %s42
      %45 = dma.vmem_to_hbm [thread:$0]  %s43, 64, %s1, [#allocation4]
    $region13: #{tpu_custom_call.1} parent=1 // pred_fallthru
      _
    // Predicated region
    $region14: #{tpu_custom_call.1} parent=1 // pred_check
      _
    $region15: #{tpu_custom_call.1} parent=1 // pred_check_branch
      %47 = sbr.rel (0) target = $region17
    $region16: #{tpu_custom_call.1} parent=1 // pred_region
      %48 = dma.done [#allocation4], 64
    $region17: #{tpu_custom_call.1} parent=1 // pred_fallthru
      _
    %49 = vsyncpa [#allocation3], 1
    %50 = vsyncpa [#allocation4], 1

</llo_original>
